<compile_context>
chip_gen: v7x
topology: tpu7x:2x2x1
jax: 0.10.0
libtpu: 0.0.40
codegen_flags: <defaults>
</compile_context>

<pallas_src>
import math

import jax
import jax.numpy as jnp
from jax import lax
from jax.experimental import pallas as pl
from jax.experimental.pallas import tpu as pltpu


def _make_kernel(n_true, tn, chunks_per_split, need_mask):
    """tn = elements per chunk per batch row (= tr * 128)."""

    def accumulate(x, t, inter_ref, total_ref, bce_ref, mask=None):
        # Shared transcendentals: sigmoid and the numerically-stable BCE
        # softplus term both come from a single e = exp(-|x|).
        e = jnp.exp(-jnp.abs(x))
        inv_1pe = 1.0 / (1.0 + e)
        sig = jnp.where(x >= 0.0, inv_1pe, e * inv_1pe)
        bce_elem = jnp.maximum(x, 0.0) - x * t + jnp.log1p(e)
        if mask is not None:
            sig = sig * mask            # padded/OOB logit would give 0.5 otherwise
            bce_elem = bce_elem * mask  # padded/OOB (0, 0) would give log(2) otherwise
        # Reduce only across the sublane-row axis; the 128-lane axis stays
        # dense so the accumulator stores are full-width vst (no vst.msk).
        inter_ref[...] += jnp.sum(sig * t, axis=1)[None]
        total_ref[...] += jnp.sum(sig + t, axis=1)[None]
        bce_ref[...] += jnp.sum(bce_elem, axis=1)[None]

    def kernel(x_ref, t_ref, inter_ref, total_ref, bce_ref):
        s = pl.program_id(0)
        c = pl.program_id(1)

        # Outputs act as resident accumulators across the inner ("arbitrary")
        # axis: init at the first chunk of each split.
        @pl.when(c == 0)
        def _init():
            inter_ref[...] = jnp.zeros_like(inter_ref)
            total_ref[...] = jnp.zeros_like(total_ref)
            bce_ref[...] = jnp.zeros_like(bce_ref)

        x = x_ref[...].astype(jnp.float32)      # (B, TR, 128)
        t = t_ref[...].astype(jnp.float32)

        if not need_mask:
            accumulate(x, t, inter_ref, total_ref, bce_ref)
        else:
            gchunk = s * chunks_per_split + c
            is_tail = (gchunk + 1) * tn > n_true   # partially or fully OOB chunk

            @pl.when(jnp.logical_not(is_tail))
            def _bulk():
                accumulate(x, t, inter_ref, total_ref, bce_ref)

            @pl.when(is_tail)
            def _tail():
                base = gchunk * tn
                row = lax.broadcasted_iota(jnp.int32, x.shape, 1)
                lane = lax.broadcasted_iota(jnp.int32, x.shape, 2)
                maskb = (base + row * 128 + lane) < n_true
                # Zero x/t *before* the math so OOB garbage never propagates.
                xm = jnp.where(maskb, x, 0.0)
                tm = jnp.where(maskb, t, 0.0)
                accumulate(xm, tm, inter_ref, total_ref, bce_ref,
                           mask=maskb.astype(jnp.float32))

    return kernel


def combined_loss(inputs, targets, smooth=1e-6, bce_weight=0.5, iou_weight=0.5,
                  *, logits_stream_dtype=None, vmem_block_bytes=12 * 1024 * 1024,
                  num_splits=1):
    """inputs/targets: (B, C, H, W) logits / {0,1} targets. Returns scalar loss."""
    B = inputs.shape[0]
    n_true = math.prod(inputs.shape[1:])

    x = inputs.reshape(B, n_true)
    if logits_stream_dtype is not None:
        x = x.astype(logits_stream_dtype)      # optional bf16 streaming for logits
    # Targets are {0,1}: bf16 is exact and cuts their HBM traffic in half.
    t = targets.reshape(B, n_true).astype(jnp.bfloat16)

    x_bytes = jnp.dtype(x.dtype).itemsize
    t_bytes = jnp.dtype(t.dtype).itemsize

    n_rows = -(-n_true // 128)                 # rows of 128 lanes (ceil)
    n_lane = n_rows * 128

    # Pad only when unavoidable, and only to the 128-lane boundary (so the
    # (B, n_rows, 128) reshape is legal).  No padding to tile/split multiples.
    if n_lane != n_true:
        pad = n_lane - n_true
        x = jnp.pad(x, ((0, 0), (0, pad)))
        t = jnp.pad(t, ((0, 0), (0, pad)))
    x3 = x.reshape(B, n_rows, 128)
    t3 = t.reshape(B, n_rows, 128)

    # --- tile: rows per chunk so (2 inputs) x (2 pipeline buffers) fits budget.
    denom = 2 * B * 128 * (x_bytes + t_bytes)
    tr = max(8, (vmem_block_bytes // denom) // 8 * 8)
    if tr >= n_rows:
        tr = n_rows
        num_chunks = 1
    else:
        num_chunks = -(-n_rows // tr)
    tn = tr * 128

    splits = num_splits if num_chunks >= num_splits else 1
    chunks_per_split = -(-num_chunks // splits)
    # Masking needed iff the grid covers more elements than actually exist
    # (ragged lane tail, ragged last chunk, or empty round-up chunks).
    need_mask = splits * chunks_per_split * tn > n_true

    kernel = _make_kernel(n_true, tn, chunks_per_split, need_mask)

    # Clamp the block index so round-up chunks (splits > 1) never start past
    # the array end; their contribution is zeroed by the in-kernel mask.
    def in_map(s, c):
        return (0, jnp.minimum(s * chunks_per_split + c, num_chunks - 1), 0)

    in_spec = pl.BlockSpec((B, tr, 128), in_map)
    out_spec = pl.BlockSpec((1, B, 128), lambda s, c: (s, 0, 0))
    out_shape = [jax.ShapeDtypeStruct((splits, B, 128), jnp.float32)] * 3

    cost = pl.CostEstimate(
        flops=10 * B * n_true,
        transcendentals=2 * B * n_true,
        bytes_accessed=B * n_lane * (x_bytes + t_bytes) + 3 * splits * B * 128 * 4,
    )

    inter_p, total_p, bce_p = pl.pallas_call(
        kernel,
        out_shape=out_shape,
        grid_spec=pl.GridSpec(
            grid=(splits, chunks_per_split),
            in_specs=[in_spec, in_spec],
            out_specs=[out_spec, out_spec, out_spec],
        ),
        compiler_params=pltpu.CompilerParams(
            dimension_semantics=("parallel", "arbitrary")),
        cost_estimate=cost,
    )(x3, t3)

    # Tiny epilogue: final 128->1 lane reduce + the ~10-flop loss combination.
    inter = jnp.sum(inter_p, axis=(0, 2))      # (B,)
    total = jnp.sum(total_p, axis=(0, 2))      # (B,)
    union = total - inter
    iou = (inter + smooth) / (union + smooth)
    iou_loss = 1.0 - jnp.mean(iou)
    bce = jnp.sum(bce_p) / (B * n_true)
    return bce_weight * bce + iou_weight * iou_loss


def _reference_combined_loss(inputs, targets, smooth=1e-6,
                             bce_weight=0.5, iou_weight=0.5):
    """Pure-JAX reference mirroring the PyTorch module semantics."""
    B = inputs.shape[0]
    x = inputs.reshape(B, -1).astype(jnp.float32)
    t = targets.reshape(B, -1).astype(jnp.float32)

    sig = jax.nn.sigmoid(x)
    inter = jnp.sum(sig * t, axis=1)
    total = jnp.sum(sig + t, axis=1)
    union = total - inter
    iou = (inter + smooth) / (union + smooth)
    iou_loss = 1.0 - jnp.mean(iou)

    bce = jnp.mean(jnp.maximum(x, 0.0) - x * t + jnp.log1p(jnp.exp(-jnp.abs(x))))
    return bce_weight * bce + iou_weight * iou_loss


if __name__ == "__main__":
    key = jax.random.PRNGKey(0)

    cases = [
        # (shape, logits_stream_dtype, vmem_block_bytes, num_splits, tol)
        ((2, 4, 16, 16), None, None, 1, 1e-5),           # N % 128 == 0: zero-copy, no mask
        ((2, 3, 100, 111), None, 128 * 1024, 1, 1e-4),   # multi-chunk + ragged tail mask
        ((2, 3, 100, 111), None, 128 * 1024, 2, 1e-4),   # 2-way split (incl. empty chunk)
        ((2, 4, 16, 16), jnp.bfloat16, None, 1, 1e-4),   # bf16 logit streaming
    ]

    for idx, (shape, sdt, bb, ns, tol) in enumerate(cases):
        k1, k2 = jax.random.split(jax.random.fold_in(key, idx))
        logits = jax.random.normal(k1, shape, dtype=jnp.float32)
        targets = (jax.random.uniform(k2, shape) > 0.5).astype(jnp.float32)

        kwargs = {} if bb is None else {"vmem_block_bytes": bb}
        loss = combined_loss(logits, targets, logits_stream_dtype=sdt,
                             num_splits=ns, **kwargs)
        loss = jax.block_until_ready(loss)

        ref_x = logits if sdt is None else logits.astype(sdt).astype(jnp.float32)
        ref = _reference_combined_loss(ref_x, targets)
        assert jnp.allclose(loss, ref, rtol=tol, atol=tol), (shape, float(loss), float(ref))

    print("KERNEL_OK")
</pallas_src>

<mosaic_0001>
module attributes {stable_mosaic.version = 11 : i64} {
  func.func @kernel(%arg0: i32, %arg1: i32, %arg2: memref<2x8x128xf32, #tpu.memory_space<vmem>>, %arg3: memref<2x8x128xbf16, #tpu.memory_space<vmem>>, %arg4: memref<1x2x128xf32, #tpu.memory_space<vmem>>, %arg5: memref<1x2x128xf32, #tpu.memory_space<vmem>>, %arg6: memref<1x2x128xf32, #tpu.memory_space<vmem>>) attributes {dimension_semantics = [#tpu.dimension_semantics<parallel>, #tpu.dimension_semantics<arbitrary>], iteration_bounds = array<i64: 1, 1>, scalar_prefetch = 0 : i64, scratch_operands = 0 : i64, tpu.core_type = #tpu.core_type<tc>, window_params = [{transform_indices = @transform_0, window_bounds = array<i64: 2, 8, 128>}, {transform_indices = @transform_1, window_bounds = array<i64: 2, 8, 128>}, {transform_indices = @transform_2, window_bounds = array<i64: 1, 2, 128>}, {transform_indices = @transform_3, window_bounds = array<i64: 1, 2, 128>}, {transform_indices = @transform_4, window_bounds = array<i64: 1, 2, 128>}]} {
    %c0_i32 = arith.constant 0 : i32
    %0 = arith.cmpi eq, %arg1, %c0_i32 : i32
    %1 = arith.extui %0 : i1 to i32
    %c0_i32_0 = arith.constant 0 : i32
    %2 = arith.cmpi ne, %1, %c0_i32_0 : i32
    scf.if %2 {
      %cst_31 = arith.constant 0.000000e+00 : f32
      %41 = vector.broadcast %cst_31 : f32 to vector<1x2x128xf32>
      %c0_32 = arith.constant 0 : index
      %c0_33 = arith.constant 0 : index
      %c0_34 = arith.constant 0 : index
      %42 = vector.load %arg4[%c0_32, %c0_33, %c0_34] : memref<1x2x128xf32, #tpu.memory_space<vmem>>, vector<1x2x128xf32>
      tpu.vector_store %arg4[%c0_32, %c0_33, %c0_34], %41 {strides = array<i32>} : memref<1x2x128xf32, #tpu.memory_space<vmem>>, vector<1x2x128xf32>,
      %cst_35 = arith.constant 0.000000e+00 : f32
      %43 = vector.broadcast %cst_35 : f32 to vector<1x2x128xf32>
      %c0_36 = arith.constant 0 : index
      %c0_37 = arith.constant 0 : index
      %c0_38 = arith.constant 0 : index
      %44 = vector.load %arg5[%c0_36, %c0_37, %c0_38] : memref<1x2x128xf32, #tpu.memory_space<vmem>>, vector<1x2x128xf32>
      tpu.vector_store %arg5[%c0_36, %c0_37, %c0_38], %43 {strides = array<i32>} : memref<1x2x128xf32, #tpu.memory_space<vmem>>, vector<1x2x128xf32>,
      %cst_39 = arith.constant 0.000000e+00 : f32
      %45 = vector.broadcast %cst_39 : f32 to vector<1x2x128xf32>
      %c0_40 = arith.constant 0 : index
      %c0_41 = arith.constant 0 : index
      %c0_42 = arith.constant 0 : index
      %46 = vector.load %arg6[%c0_40, %c0_41, %c0_42] : memref<1x2x128xf32, #tpu.memory_space<vmem>>, vector<1x2x128xf32>
      tpu.vector_store %arg6[%c0_40, %c0_41, %c0_42], %45 {strides = array<i32>} : memref<1x2x128xf32, #tpu.memory_space<vmem>>, vector<1x2x128xf32>,
    } else {
    }
    %c0 = arith.constant 0 : index
    %c0_1 = arith.constant 0 : index
    %c0_2 = arith.constant 0 : index
    %3 = vector.load %arg2[%c0, %c0_1, %c0_2] : memref<2x8x128xf32, #tpu.memory_space<vmem>>, vector<2x8x128xf32>
    %c0_3 = arith.constant 0 : index
    %c0_4 = arith.constant 0 : index
    %c0_5 = arith.constant 0 : index
    %4 = vector.load %arg3[%c0_3, %c0_4, %c0_5] : memref<2x8x128xbf16, #tpu.memory_space<vmem>>, vector<2x8x128xbf16>
    %5 = arith.extf %4 : vector<2x8x128xbf16> to vector<2x8x128xf32>
    %6 = math.absf %3 : vector<2x8x128xf32>
    %cst = arith.constant 0.000000e+00 : f32
    %7 = vector.broadcast %cst : f32 to vector<2x8x128xf32>
    %8 = arith.subf %7, %6 : vector<2x8x128xf32>
    %9 = math.exp %8 : vector<2x8x128xf32>
    %cst_6 = arith.constant 1.000000e+00 : f32
    %10 = vector.broadcast %cst_6 : f32 to vector<2x8x128xf32>
    %11 = arith.addf %10, %9 : vector<2x8x128xf32>
    %cst_7 = arith.constant 1.000000e+00 : f32
    %12 = vector.broadcast %cst_7 : f32 to vector<2x8x128xf32>
    %13 = arith.divf %12, %11 : vector<2x8x128xf32>
    %cst_8 = arith.constant 0.000000e+00 : f32
    %14 = vector.broadcast %cst_8 : f32 to vector<2x8x128xf32>
    %15 = arith.cmpf oge, %3, %14 : vector<2x8x128xf32>
    %16 = arith.mulf %9, %13 : vector<2x8x128xf32>
    %17 = arith.select %15, %13, %16 : vector<2x8x128xi1>, vector<2x8x128xf32>
    %cst_9 = arith.constant 0.000000e+00 : f32
    %18 = vector.broadcast %cst_9 : f32 to vector<2x8x128xf32>
    %19 = arith.maximumf %3, %18 : vector<2x8x128xf32>
    %20 = arith.mulf %3, %5 : vector<2x8x128xf32>
    %21 = arith.subf %19, %20 : vector<2x8x128xf32>
    %22 = math.log1p %9 : vector<2x8x128xf32>
    %23 = arith.addf %21, %22 : vector<2x8x128xf32>
    %c0_10 = arith.constant 0 : index
    %c0_11 = arith.constant 0 : index
    %c0_12 = arith.constant 0 : index
    %24 = vector.load %arg4[%c0_10, %c0_11, %c0_12] : memref<1x2x128xf32, #tpu.memory_space<vmem>>, vector<1x2x128xf32>
    %25 = arith.mulf %17, %5 : vector<2x8x128xf32>
    %cst_13 = arith.constant dense<0.000000e+00> : vector<2x128xf32>
    %26 = vector.multi_reduction <add>, %25, %cst_13 [1] : vector<2x8x128xf32> to vector<2x128xf32>
    %27 = vector.shape_cast %26 : vector<2x128xf32> to vector<1x2x128xf32>
    %28 = arith.addf %24, %27 : vector<1x2x128xf32>
    %c0_14 = arith.constant 0 : index
    %c0_15 = arith.constant 0 : index
    %c0_16 = arith.constant 0 : index
    %29 = vector.load %arg4[%c0_14, %c0_15, %c0_16] : memref<1x2x128xf32, #tpu.memory_space<vmem>>, vector<1x2x128xf32>
    tpu.vector_store %arg4[%c0_14, %c0_15, %c0_16], %28 {strides = array<i32>} : memref<1x2x128xf32, #tpu.memory_space<vmem>>, vector<1x2x128xf32>,
    %c0_17 = arith.constant 0 : index
    %c0_18 = arith.constant 0 : index
    %c0_19 = arith.constant 0 : index
    %30 = vector.load %arg5[%c0_17, %c0_18, %c0_19] : memref<1x2x128xf32, #tpu.memory_space<vmem>>, vector<1x2x128xf32>
    %31 = arith.addf %17, %5 : vector<2x8x128xf32>
    %cst_20 = arith.constant dense<0.000000e+00> : vector<2x128xf32>
    %32 = vector.multi_reduction <add>, %31, %cst_20 [1] : vector<2x8x128xf32> to vector<2x128xf32>
    %33 = vector.shape_cast %32 : vector<2x128xf32> to vector<1x2x128xf32>
    %34 = arith.addf %30, %33 : vector<1x2x128xf32>
    %c0_21 = arith.constant 0 : index
    %c0_22 = arith.constant 0 : index
    %c0_23 = arith.constant 0 : index
    %35 = vector.load %arg5[%c0_21, %c0_22, %c0_23] : memref<1x2x128xf32, #tpu.memory_space<vmem>>, vector<1x2x128xf32>
    tpu.vector_store %arg5[%c0_21, %c0_22, %c0_23], %34 {strides = array<i32>} : memref<1x2x128xf32, #tpu.memory_space<vmem>>, vector<1x2x128xf32>,
    %c0_24 = arith.constant 0 : index
    %c0_25 = arith.constant 0 : index
    %c0_26 = arith.constant 0 : index
    %36 = vector.load %arg6[%c0_24, %c0_25, %c0_26] : memref<1x2x128xf32, #tpu.memory_space<vmem>>, vector<1x2x128xf32>
    %cst_27 = arith.constant dense<0.000000e+00> : vector<2x128xf32>
    %37 = vector.multi_reduction <add>, %23, %cst_27 [1] : vector<2x8x128xf32> to vector<2x128xf32>
    %38 = vector.shape_cast %37 : vector<2x128xf32> to vector<1x2x128xf32>
    %39 = arith.addf %36, %38 : vector<1x2x128xf32>
    %c0_28 = arith.constant 0 : index
    %c0_29 = arith.constant 0 : index
    %c0_30 = arith.constant 0 : index
    %40 = vector.load %arg6[%c0_28, %c0_29, %c0_30] : memref<1x2x128xf32, #tpu.memory_space<vmem>>, vector<1x2x128xf32>
    tpu.vector_store %arg6[%c0_28, %c0_29, %c0_30], %39 {strides = array<i32>} : memref<1x2x128xf32, #tpu.memory_space<vmem>>, vector<1x2x128xf32>,
    return
  }
  func.func @transform_0(%arg0: i32, %arg1: i32) -> (i32, i32, i32) {
    %c1_i32 = arith.constant 1 : i32
    %0 = arith.muli %arg0, %c1_i32 : i32
    %1 = arith.addi %0, %arg1 : i32
    %c0_i32 = arith.constant 0 : i32
    %2 = arith.minsi %1, %c0_i32 : i32
    %c0_i32_0 = arith.constant 0 : i32
    %c0_i32_1 = arith.constant 0 : i32
    %c0_i32_2 = arith.constant 0 : i32
    return %c0_i32_0, %2, %c0_i32_1 : i32, i32, i32
  }
  func.func @transform_1(%arg0: i32, %arg1: i32) -> (i32, i32, i32) {
    %c1_i32 = arith.constant 1 : i32
    %0 = arith.muli %arg0, %c1_i32 : i32
    %1 = arith.addi %0, %arg1 : i32
    %c0_i32 = arith.constant 0 : i32
    %2 = arith.minsi %1, %c0_i32 : i32
    %c0_i32_0 = arith.constant 0 : i32
    %c0_i32_1 = arith.constant 0 : i32
    %c0_i32_2 = arith.constant 0 : i32
    return %c0_i32_0, %2, %c0_i32_1 : i32, i32, i32
  }
  func.func @transform_2(%arg0: i32, %arg1: i32) -> (i32, i32, i32) {
    %c0_i32 = arith.constant 0 : i32
    %c0_i32_0 = arith.constant 0 : i32
    %c0_i32_1 = arith.constant 0 : i32
    return %arg0, %c0_i32, %c0_i32_0 : i32, i32, i32
  }
  func.func @transform_3(%arg0: i32, %arg1: i32) -> (i32, i32, i32) {
    %c0_i32 = arith.constant 0 : i32
    %c0_i32_0 = arith.constant 0 : i32
    %c0_i32_1 = arith.constant 0 : i32
    return %arg0, %c0_i32, %c0_i32_0 : i32, i32, i32
  }
  func.func @transform_4(%arg0: i32, %arg1: i32) -> (i32, i32, i32) {
    %c0_i32 = arith.constant 0 : i32
    %c0_i32_0 = arith.constant 0 : i32
    %c0_i32_1 = arith.constant 0 : i32
    return %arg0, %c0_i32, %c0_i32_0 : i32, i32, i32
  }
}

</mosaic_0001>

<llo_original>
// kernel: tpu_custom_call.1
$region0: #{tpu_custom_call.1}
  #allocation0 [shape = 'u32[]', space=smem, size = 0x4, offset = 0x4, fixed_abs, tag = 'smem constant byte address 0x4 - core index']
  #allocation1 [shape = 'u32[144,128]{1,0:T(1,128)}', space=vmem, size = 0x12000, scoped, tag = 'internal scratch']
  %s0 = inlined_call_operand.hbm [shape: f32[2,8,128], index: 0, kind: input, shape index: {}]
  %s1 = inlined_call_operand.hbm [shape: bf16[2,8,128], index: 1, kind: input, shape index: {}]
  %s2 = inlined_call_operand.hbm [shape: f32[1,2,128], index: 2, kind: output, shape index: {0}]
  %s3 = inlined_call_operand.hbm [shape: f32[1,2,128], index: 3, kind: output, shape index: {1}]
  %s4 = inlined_call_operand.hbm [shape: f32[1,2,128], index: 4, kind: output, shape index: {2}]
  %5 = xla_tuple %s2, %s3, %s4
  %s6 = sld [smem:[#allocation0]]
  $region46: #{tpu_custom_call.1} parent=0
    _
  %s8 = ssub.s32 1, %s6
  %s9 = scalar_select 0, %s8, %s6
  $region1: #{tpu_custom_call.1} parent=0
    #allocation2 [shape = 'u8[8192]{0}', space=vmem, size = 0x2000, scoped, tag = 'input window, operand 0, single buffered']
    #allocation3 [shape = 's32[1]{0}', space=sflag, size = 0x4, scoped, tag = 'scoped memory for tpu_custom_call.1']
    #allocation4 [shape = 's32[1]{0}', space=sflag, size = 0x4, scoped, tag = 'scoped memory for tpu_custom_call.1']
    #allocation5 [shape = 'u8[4096]{0}', space=vmem, size = 0x1000, scoped, tag = 'input window, operand 1, single buffered']
    #allocation6 [shape = 's32[1]{0}', space=sflag, size = 0x4, scoped, tag = 'scoped memory for tpu_custom_call.1']
    #allocation7 [shape = 'u8[1024]{0}', space=vmem, size = 0x400, scoped, tag = 'output window, operand 0, single buffered']
    #allocation8 [shape = 'u8[1024]{0}', space=vmem, size = 0x400, scoped, tag = 'output window, operand 1, single buffered']
    #allocation9 [shape = 's32[1]{0}', space=sflag, size = 0x4, scoped, tag = 'scoped memory for tpu_custom_call.1']
    #allocation10 [shape = 'u8[1024]{0}', space=vmem, size = 0x400, scoped, tag = 'output window, operand 2, single buffered']
    %10 = vsyncpa [#allocation3], 0
    %11 = vsyncpa [#allocation6], 0
    %12 = vsyncpa [#allocation4], 0
    %13 = vsyncpa [#allocation9], 0
    // Predicated region
    $region2: #{tpu_custom_call.1} parent=1 // pred_check
      _
    $region3: #{tpu_custom_call.1} parent=1 // pred_check_branch
      %15 = sbr.rel (0) target = $region5
    $region4: #{tpu_custom_call.1} parent=1 // pred_region
      %s16 = sadd.s32 0, 0
      %p17 = scmp.lt.s32.totalorder %s16, 0
      %s18 = scalar_select %p17, %s16, 0
      %s20 = ssub.s32 256, 256
      %21 = vsyncadd [#allocation3], %s20
      %s22 = smul.addr %s18, 128
      %s23 = scalar_lea.hbm %s0, %s22
      %s24 = sshll.u32 [#allocation2], 4
      %s25 = int_to_ptr.vmem [resolvable:$true] %s24
      %30 = dma.hbm_to_vmem [thread:$0]  %s23, 256, %s25, [#allocation3], 128, 128, 8
    $region5: #{tpu_custom_call.1} parent=1 // pred_fallthru
      _
    // Predicated region
    $region6: #{tpu_custom_call.1} parent=1 // pred_check
      _
    $region7: #{tpu_custom_call.1} parent=1 // pred_check_branch
      %32 = sbr.rel (0) target = $region9
    $region8: #{tpu_custom_call.1} parent=1 // pred_region
      %s33 = sadd.s32 0, 0
      %p34 = scmp.lt.s32.totalorder %s33, 0
      %s35 = scalar_select %p34, %s33, 0
      %s37 = ssub.s32 128, 128
      %38 = vsyncadd [#allocation6], %s37
      %s39 = smul.addr %s35, 64
      %s40 = scalar_lea.hbm %s1, %s39
      %s41 = sshll.u32 [#allocation5], 4
      %s42 = int_to_ptr.vmem [resolvable:$true] %s41
      %47 = dma.hbm_to_vmem [thread:$0]  %s40, 128, %s42, [#allocation6], 64, 64, 4
    $region9: #{tpu_custom_call.1} parent=1 // pred_fallthru
      _
    // Predicated region
    $region10: #{tpu_custom_call.1} parent=1 // pred_check
      _
    $region11: #{tpu_custom_call.1} parent=1 // pred_check_branch
      %49 = sbr.rel (0) target = $region13
    $region12: #{tpu_custom_call.1} parent=1 // pred_region
      %50 = dma.done [#allocation3], 256
    $region13: #{tpu_custom_call.1} parent=1 // pred_fallthru
      _
    // Predicated region
    $region14: #{tpu_custom_call.1} parent=1 // pred_check
      _
    $region15: #{tpu_custom_call.1} parent=1 // pred_check_branch
      %52 = sbr.rel (0) target = $region17
    $region16: #{tpu_custom_call.1} parent=1 // pred_region
      %53 = dma.done [#allocation6], 128
    $region17: #{tpu_custom_call.1} parent=1 // pred_fallthru
      _
    %s54 = sadd.s32 0, 0
    %p55 = scmp.lt.s32.totalorder %s54, 0
    %s56 = scalar_select %p55, %s54, 0
    %s57 = sadd.s32 0, 0
    %p58 = scmp.lt.s32.totalorder %s57, 0
    %s59 = scalar_select %p58, %s57, 0
    %p60 = scmp.eq.s32.totalorder 0, 0
    // Predicated region
    $region18: #{tpu_custom_call.1} parent=1 // pred_check
      %p61 = pneg %p60
    $region19: #{tpu_custom_call.1} parent=1 // pred_check_branch
      %63 = sbr.rel (%p61) target = $region21
    $region20: #{tpu_custom_call.1} parent=1 // pred_region
      %64 = vst [vmem:[#allocation7] sm:$0x3] 0.0
      %65 = vst [vmem:[#allocation8] sm:$0x3] 0.0
      %66 = vst [vmem:[#allocation10] sm:$0x3] 0.0
    $region21: #{tpu_custom_call.1} parent=1 // pred_fallthru
      _
    %v67 = vld [vmem:[#allocation2] sm:$0xff]
    %v68 = vld [vmem:[#allocation2 + $0x8] sm:$0xff]
    %v69 = vld [vmem:[#allocation5] sm:$0xf]
    %v70 = vld [vmem:[#allocation5 + $0x4] sm:$0xf]
    %v71 = vunpack.c.l.bf16 %v69
    %v72 = vunpack.c.l.bf16 %v70
    %v73 = vand.u32 2147483647, %v67
    %v74 = vand.u32 2147483647, %v68
    %v75 = vsub.f32 0.0, %v73
    %v76 = vsub.f32 0.0, %v74
    %v77 = vmul.f32 %v75, 1.442695
    %v78 = vpow.pop %v77
    %v79 = vmul.f32 %v76, 1.442695
    %v80 = vpow.pop %v79
    %v81 = vadd.f32 %v78, 1.0
    %v82 = vadd.f32 %v80, 1.0
    %v83 = vrcp.pop %v81
    %v84 = vmul.f32 1.0, %v83
    %v85 = vrcp.pop %v82
    %v86 = vmul.f32 1.0, %v85
    %vm87 = vcmp.ge.f32.partialorder %v67, 0.0
    %vm88 = vcmp.ge.f32.partialorder %v68, 0.0
    %v89 = vmul.f32 %v78, %v84
    %v90 = vmul.f32 %v80, %v86
    %v91 = vsel %vm87, %v84, %v89
    %v92 = vsel %vm88, %v86, %v90
    %v93 = vmax.f32 %v67, 0.0
    %v94 = vmax.f32 %v68, 0.0
    %v95 = vmul.f32 %v67, %v71
    %v96 = vmul.f32 %v68, %v72
    %v97 = vsub.f32 %v93, %v95
    %v98 = vsub.f32 %v94, %v96
    %v99 = vadd.f32 %v78, 1.0
    %v100 = vlog2.pop %v99
    %v101 = vmul.f32 %v100, 0.6931472
    %v102 = vmul.f32 -0.5, %v78
    %v103 = vadd.f32 %v102, 1.0
    %v104 = vmul.f32 %v103, %v78
    %v105 = vand.u32 2147483647, %v78
    %vm106 = vcmp.lt.f32.partialorder %v105, 0.0004427343
    %v107 = vsel %vm106, %v104, %v101
    %v108 = vadd.f32 %v80, 1.0
    %v109 = vlog2.pop %v108
    %v110 = vmul.f32 %v109, 0.6931472
    %v111 = vmul.f32 -0.5, %v80
    %v112 = vadd.f32 %v111, 1.0
    %v113 = vmul.f32 %v112, %v80
    %v114 = vand.u32 2147483647, %v80
    %vm115 = vcmp.lt.f32.partialorder %v114, 0.0004427343
    %v116 = vsel %vm115, %v113, %v110
    %v117 = vadd.f32 %v97, %v107
    %v118 = vadd.f32 %v98, %v116
    %v119 = vld [vmem:[#allocation7] sm:$0x3]
    %v120 = vmul.f32 %v91, %v71
    %v121 = vmul.f32 %v92, %v72
    %v122 = vrot.slane %v120, 4
    %v123 = vadd.f32 %v120, %v122
    %v124 = vrot.slane %v123, 2
    %v125 = vadd.f32 %v123, %v124
    %v126 = vrot.slane %v125, 1
    %v127 = vadd.f32 %v125, %v126
    %v128 = vrot.slane %v121, 4
    %v129 = vadd.f32 %v121, %v128
    %v130 = vrot.slane %v129, 2
    %v131 = vadd.f32 %v129, %v130
    %v132 = vrot.slane %v131, 1
    %v133 = vadd.f32 %v131, %v132
    %vm136 = vcmask 1041409
    %v137 = vsel %vm136, %v133, %v127
    %v139 = vadd.f32 %v119, %v137
    %140 = vst [vmem:[#allocation7] sm:$0x3] %v139
    %v141 = vld [vmem:[#allocation8] sm:$0x3]
    %v142 = vadd.f32 %v91, %v71
    %v143 = vadd.f32 %v92, %v72
    %v144 = vrot.slane %v142, 4
    %v145 = vadd.f32 %v142, %v144
    %v146 = vrot.slane %v145, 2
    %v147 = vadd.f32 %v145, %v146
    %v148 = vrot.slane %v147, 1
    %v149 = vadd.f32 %v147, %v148
    %v150 = vrot.slane %v143, 4
    %v151 = vadd.f32 %v143, %v150
    %v152 = vrot.slane %v151, 2
    %v153 = vadd.f32 %v151, %v152
    %v154 = vrot.slane %v153, 1
    %v155 = vadd.f32 %v153, %v154
    %v158 = vsel %vm136, %v155, %v149
    %v160 = vadd.f32 %v141, %v158
    %161 = vst [vmem:[#allocation8] sm:$0x3] %v160
    %v162 = vld [vmem:[#allocation10] sm:$0x3]
    %v163 = vrot.slane %v117, 4
    %v164 = vadd.f32 %v117, %v163
    %v165 = vrot.slane %v164, 2
    %v166 = vadd.f32 %v164, %v165
    %v167 = vrot.slane %v166, 1
    %v168 = vadd.f32 %v166, %v167
    %v169 = vrot.slane %v118, 4
    %v170 = vadd.f32 %v118, %v169
    %v171 = vrot.slane %v170, 2
    %v172 = vadd.f32 %v170, %v171
    %v173 = vrot.slane %v172, 1
    %v174 = vadd.f32 %v172, %v173
    %v177 = vsel %vm136, %v174, %v168
    %v179 = vadd.f32 %v162, %v177
    %180 = vst [vmem:[#allocation10] sm:$0x3] %v179
    // Predicated region
    $region22: #{tpu_custom_call.1} parent=1 // pred_check
      _
    $region23: #{tpu_custom_call.1} parent=1 // pred_check_branch
      %182 = sbr.rel (0) target = $region25
    $region24: #{tpu_custom_call.1} parent=1 // pred_region
      %s184 = ssub.s32 32, 32
      %185 = vsyncadd [#allocation4], %s184
      %s187 = sshll.u32 [#allocation7], 4
      %s188 = int_to_ptr.vmem [resolvable:$true] %s187
      %190 = dma.vmem_to_hbm [thread:$0]  %s188, 32, %s2, [#allocation4]
    $region25: #{tpu_custom_call.1} parent=1 // pred_fallthru
      _
    // Predicated region
    $region26: #{tpu_custom_call.1} parent=1 // pred_check
      _
    $region27: #{tpu_custom_call.1} parent=1 // pred_check_branch
      %192 = sbr.rel (0) target = $region29
    $region28: #{tpu_custom_call.1} parent=1 // pred_region
      %s194 = ssub.s32 32, 32
      %195 = vsyncadd [#allocation9], %s194
      %s197 = sshll.u32 [#allocation8], 4
      %s198 = int_to_ptr.vmem [resolvable:$true] %s197
      %200 = dma.vmem_to_hbm [thread:$0]  %s198, 32, %s3, [#allocation9]
    $region29: #{tpu_custom_call.1} parent=1 // pred_fallthru
      _
    // Predicated region
    $region30: #{tpu_custom_call.1} parent=1 // pred_check
      _
    $region31: #{tpu_custom_call.1} parent=1 // pred_check_branch
      %202 = sbr.rel (0) target = $region33
    $region32: #{tpu_custom_call.1} parent=1 // pred_region
      %s204 = ssub.s32 32, 32
      %205 = vsyncadd [#allocation9], %s204
      %s207 = sshll.u32 [#allocation10], 4
      %s208 = int_to_ptr.vmem [resolvable:$true] %s207
      %210 = dma.vmem_to_hbm [thread:$0]  %s208, 32, %s4, [#allocation9]
    $region33: #{tpu_custom_call.1} parent=1 // pred_fallthru
      _
    // Predicated region
    $region34: #{tpu_custom_call.1} parent=1 // pred_check
      _
    $region35: #{tpu_custom_call.1} parent=1 // pred_check_branch
      %212 = sbr.rel (0) target = $region37
    $region36: #{tpu_custom_call.1} parent=1 // pred_region
      %213 = dma.done [#allocation4], 32
    $region37: #{tpu_custom_call.1} parent=1 // pred_fallthru
      _
    // Predicated region
    $region38: #{tpu_custom_call.1} parent=1 // pred_check
      _
    $region39: #{tpu_custom_call.1} parent=1 // pred_check_branch
      %215 = sbr.rel (0) target = $region41
    $region40: #{tpu_custom_call.1} parent=1 // pred_region
      %216 = dma.done [#allocation9], 32
    $region41: #{tpu_custom_call.1} parent=1 // pred_fallthru
      _
    // Predicated region
    $region42: #{tpu_custom_call.1} parent=1 // pred_check
      _
    $region43: #{tpu_custom_call.1} parent=1 // pred_check_branch
      %218 = sbr.rel (0) target = $region45
    $region44: #{tpu_custom_call.1} parent=1 // pred_region
      %219 = dma.done [#allocation9], 32
    $region45: #{tpu_custom_call.1} parent=1 // pred_fallthru
      _
    %220 = vsyncpa [#allocation3], 1
    %221 = vsyncpa [#allocation6], 1
    %222 = vsyncpa [#allocation4], 1
    %223 = vsyncpa [#allocation9], 1

</llo_original>
